<compile_context>
chip_gen: v7x
topology: tpu7x:2x2x1
jax: 0.10.0
libtpu: 0.0.40
codegen_flags: <defaults>
</compile_context>

<pallas_src>
import jax
import jax.numpy as jnp
from jax.experimental import pallas as pl
from jax.experimental.pallas import tpu as pltpu

IN_FEATURES = 9
HIDDEN = 32

# ---- packed parameter slabs --------------------------------------------------
# Weight slab (stored in the MXU operand dtype: f32 or bf16); every row slice
# is 8-aligned:
#   rows  0:32, lanes 0:9   -> W1 (32, 9)   (torch layout: out_features x in_features)
#   rows 32:64, lanes 0:32  -> W2 (32, 32)
#   rows 64:80, lanes 0:32  -> W3 (9, 32) zero-padded to (16, 32)
W_SLAB_SHAPE = (80, 32)
# Bias slab (always f32), a single column:
#   rows 0:32 -> b1 (32,) ; rows 32:64 -> b2 (32,) ; rows 64:80 -> b3 (9,) zero-padded
B_SLAB_SHAPE = (80, 1)


def mlp_kernel(w_ref, b_ref, x_ref, o_ref):
    """Fused 3-layer MLP on one batch-major (TB, 9) tile of x.

    Activations stay batch-on-lanes (hidden, TB) inside the kernel, so the
    matmuls are MXU-cheap (few LHS rows, wide lane-dense RHS/result) and the
    output store is a lane-dense (9, TB) block.
    """
    cdt = w_ref.dtype                       # MXU operand dtype (f32 or bf16)

    w1 = w_ref[0:32, 0:9]                   # (32, 9)
    w2 = w_ref[32:64, 0:32]                 # (32, 32)
    w3 = w_ref[64:80, 0:32]                 # (16, 32); rows 9:16 are zeros
    b1 = b_ref[0:32, :]                     # (32, 1)  f32
    b2 = b_ref[32:64, :]                    # (32, 1)  f32
    b3 = b_ref[64:80, :]                    # (16, 1)  f32; rows 9:16 are zeros

    x = x_ref[...].astype(cdt)              # (TB, 9)  batch-major tile

    # Layer 1: contract the 9-feature axis of BOTH operands (A @ B^T form, the
    # flash-attention q@k^T pattern) -> batch lands on the lane axis without
    # any wrapper-side or in-kernel transpose.
    h1 = jax.lax.dot_general(
        w1, x, (((1,), (1,)), ((), ())),
        preferred_element_type=jnp.float32)                          # (32, TB)
    h1 = jnp.maximum(h1 + b1, 0.0)                                   # f32 VPU

    # Layers 2 / 3: plain batch-on-lanes matmuls (weights are tiny and VMEM
    # resident across the whole grid).
    h2 = jnp.dot(w2, h1.astype(cdt), preferred_element_type=jnp.float32)
    h2 = jnp.maximum(h2 + b2, 0.0)                                   # (32, TB)

    out = jnp.dot(w3, h2.astype(cdt),
                  preferred_element_type=jnp.float32) + b3           # (16, TB)
    o_ref[...] = out[0:9, :].astype(o_ref.dtype)                     # lane-dense store


def _cdiv(a, b):
    return (a + b - 1) // b


def _round_up(a, m):
    return _cdiv(a, m) * m


def nn2_forward(x, w_slab, b_slab, *, tb=16384, out_dtype=None):
    """x: (B, 9) -> (B, 9).  Same forward semantics as the torch NN2 module.

    * tb: batch-tile width per grid step (rounded to a multiple of 128).
      Default 16384 => ~1.2 MB of streamed f32 bytes per step.  On v5e either
      keep tb <= 8192 or rely on the raised vmem_limit_bytes below.
    * w_slab.dtype selects the MXU operand dtype (f32 exact / bf16 fast);
      biases, bias-add, ReLU and accumulation always stay f32 (v5e-safe).
    * Pass a bf16 x (and/or out_dtype=bf16) to halve the streamed HBM bytes.
    """
    B, F = x.shape
    assert F == IN_FEATURES, x.shape
    if out_dtype is None:
        out_dtype = x.dtype

    # ---- batch tile selection --------------------------------------------
    tb = max(128, _round_up(int(tb), 128))
    n_steps = max(1, _cdiv(B, tb))
    if B >= 4096:
        # Enough work to be worth splitting: guarantee >= 2 grid steps so both
        # v7x TensorCores get a share of the "parallel" batch axis.
        n_steps = max(n_steps, 2)
    tb_eff = _round_up(_cdiv(B, n_steps), 128)
    bp = tb_eff * n_steps

    # Only wrapper-side layout op on the input: pad trailing batch rows when
    # B does not divide the tile (no transpose, no full relayout).
    xp = x if bp == B else jnp.pad(x, ((0, bp - B), (0, 0)))

    out_t = pl.pallas_call(
        mlp_kernel,
        out_shape=jax.ShapeDtypeStruct((IN_FEATURES, bp), out_dtype),
        grid_spec=pltpu.PrefetchScalarGridSpec(
            num_scalar_prefetch=0,
            grid=(n_steps,),
            in_specs=[
                # Parameter slabs: constant index map -> DMA'd once and kept
                # VMEM-resident across every grid step.
                pl.BlockSpec(W_SLAB_SHAPE, lambda i: (0, 0)),
                pl.BlockSpec(B_SLAB_SHAPE, lambda i: (0, 0)),
                # x streamed batch-major: contiguous row-major DMA per step.
                pl.BlockSpec((tb_eff, IN_FEATURES), lambda i: (i, 0)),
            ],
            out_specs=pl.BlockSpec((IN_FEATURES, tb_eff), lambda i: (0, i)),
        ),
        compiler_params=pltpu.CompilerParams(
            dimension_semantics=("parallel",),
            vmem_limit_bytes=48 * 1024 * 1024,
        ),
    )(w_slab, b_slab, xp)

    # Padded batch columns hold ReLU(b)-derived garbage, never zeros: always
    # slice before use.  This (9, B) -> (B, 9) transpose is the single
    # remaining wrapper layout op (see header comment for why it stays here).
    return out_t[:, :B].T


# ---- parameter packing / init / reference ------------------------------------
def pack_weights(w1, w2, w3, dtype=jnp.float32):
    """Pack W1/W2/W3 (torch (out, in) layout) into one (80, 32) slab in `dtype`."""
    slab = jnp.zeros(W_SLAB_SHAPE, dtype)
    slab = slab.at[0:32, 0:9].set(w1.astype(dtype))
    slab = slab.at[32:64, 0:32].set(w2.astype(dtype))
    slab = slab.at[64:73, 0:32].set(w3.astype(dtype))   # rows 73:80 stay zero
    return slab


def pack_biases(b1, b2, b3):
    """Pack b1/b2/b3 into one (80, 1) f32 column slab."""
    slab = jnp.zeros(B_SLAB_SHAPE, jnp.float32)
    slab = slab.at[0:32, 0].set(b1)
    slab = slab.at[32:64, 0].set(b2)
    slab = slab.at[64:73, 0].set(b3)                    # rows 73:80 stay zero
    return slab


def init_params(key):
    """Mirror nn.Linear's U(-1/sqrt(fan_in), 1/sqrt(fan_in)) init."""
    def linear(k, fan_in, fan_out):
        kw, kb = jax.random.split(k)
        bound = 1.0 / jnp.sqrt(float(fan_in))
        w = jax.random.uniform(kw, (fan_out, fan_in), jnp.float32, -bound, bound)
        b = jax.random.uniform(kb, (fan_out,), jnp.float32, -bound, bound)
        return w, b

    k1, k2, k3 = jax.random.split(key, 3)
    w1, b1 = linear(k1, IN_FEATURES, HIDDEN)
    w2, b2 = linear(k2, HIDDEN, HIDDEN)
    w3, b3 = linear(k3, HIDDEN, IN_FEATURES)
    return w1, b1, w2, b2, w3, b3


def nn2_reference(x, params):
    w1, b1, w2, b2, w3, b3 = params
    h1 = jnp.maximum(x @ w1.T + b1, 0.0)
    h2 = jnp.maximum(h1 @ w2.T + b2, 0.0)
    return h2 @ w3.T + b3


if __name__ == "__main__":
    key = jax.random.PRNGKey(0)
    kx, kp, kx2 = jax.random.split(key, 3)

    params = init_params(kp)
    w1, b1, w2, b2, w3, b3 = params
    b_slab = pack_biases(b1, b2, b3)
    w_slab_f32 = pack_weights(w1, w2, w3, jnp.float32)

    # ---- small-batch check, f32 MXU operands -------------------------------
    batch = 8
    x = jax.random.normal(kx, (batch, IN_FEATURES), dtype=jnp.float32)
    ref = nn2_reference(x, params)

    out = jax.block_until_ready(nn2_forward(x, w_slab_f32, b_slab))
    assert out.shape == (batch, IN_FEATURES), out.shape
    # 2e-2 tolerance: TPU's default f32 matmul may take a reduced-precision MXU
    # path on either side (kernel or XLA reference); see header note.
    assert jnp.allclose(out, ref, atol=2e-2, rtol=2e-2), "f32 mismatch vs reference"

    # ---- multi-step grid + batch-padding path (small tile forced on purpose) --
    batch2 = 1000
    x2 = jax.random.normal(kx2, (batch2, IN_FEATURES), dtype=jnp.float32)
    ref2 = nn2_reference(x2, params)
    out2 = jax.block_until_ready(nn2_forward(x2, w_slab_f32, b_slab, tb=256))
    assert out2.shape == (batch2, IN_FEATURES), out2.shape
    assert jnp.allclose(out2, ref2, atol=2e-2, rtol=2e-2), "multi-tile mismatch"

    # ---- bf16 weight-slab (bf16 MXU operands, f32 bias/ReLU/accum) ----------
    w_slab_bf16 = pack_weights(w1, w2, w3, jnp.bfloat16)
    out_bf = jax.block_until_ready(nn2_forward(x, w_slab_bf16, b_slab))
    assert out_bf.shape == (batch, IN_FEATURES), out_bf.shape
    assert jnp.allclose(out_bf, ref, atol=1e-1, rtol=1e-1), "bf16-slab mismatch"

    # ---- bf16 activation streaming (halves streamed HBM bytes at large B) ---
    out_bfx = jax.block_until_ready(
        nn2_forward(x.astype(jnp.bfloat16), w_slab_bf16, b_slab,
                    out_dtype=jnp.float32))
    assert out_bfx.shape == (batch, IN_FEATURES), out_bfx.shape
    assert jnp.allclose(out_bfx, ref, atol=1e-1, rtol=1e-1), "bf16-io mismatch"

    print("KERNEL_OK")
</pallas_src>

<mosaic_0001>
module attributes {stable_mosaic.version = 11 : i64} {
  func.func @mlp_kernel(%arg0: i32, %arg1: memref<80x32xf32, #tpu.memory_space<vmem>>, %arg2: memref<80x1xf32, #tpu.memory_space<vmem>>, %arg3: memref<128x9xf32, #tpu.memory_space<vmem>>, %arg4: memref<9x128xf32, #tpu.memory_space<vmem>>) attributes {dimension_semantics = [#tpu.dimension_semantics<parallel>], iteration_bounds = array<i64: 1>, scalar_prefetch = 0 : i64, scratch_operands = 0 : i64, tpu.core_type = #tpu.core_type<tc>, window_params = [{pipeline_mode = #tpu.pipeline_mode<synchronous>, transform_indices = @transform_0, window_bounds = array<i64: 80, 32>}, {pipeline_mode = #tpu.pipeline_mode<synchronous>, transform_indices = @transform_1, window_bounds = array<i64: 80, 1>}, {transform_indices = @transform_2, window_bounds = array<i64: 128, 9>}, {transform_indices = @transform_3, window_bounds = array<i64: 9, 128>}]} {
    %c0 = arith.constant 0 : index
    %c0_0 = arith.constant 0 : index
    %0 = vector.load %arg1[%c0, %c0_0] : memref<80x32xf32, #tpu.memory_space<vmem>>, vector<32x9xf32>
    %c32 = arith.constant 32 : index
    %c0_1 = arith.constant 0 : index
    %1 = vector.load %arg1[%c32, %c0_1] : memref<80x32xf32, #tpu.memory_space<vmem>>, vector<32x32xf32>
    %c64 = arith.constant 64 : index
    %c0_2 = arith.constant 0 : index
    %2 = vector.load %arg1[%c64, %c0_2] : memref<80x32xf32, #tpu.memory_space<vmem>>, vector<16x32xf32>
    %c0_3 = arith.constant 0 : index
    %c0_4 = arith.constant 0 : index
    %3 = vector.load %arg2[%c0_3, %c0_4] : memref<80x1xf32, #tpu.memory_space<vmem>>, vector<32x1xf32>
    %c32_5 = arith.constant 32 : index
    %c0_6 = arith.constant 0 : index
    %4 = vector.load %arg2[%c32_5, %c0_6] : memref<80x1xf32, #tpu.memory_space<vmem>>, vector<32x1xf32>
    %c64_7 = arith.constant 64 : index
    %c0_8 = arith.constant 0 : index
    %5 = vector.load %arg2[%c64_7, %c0_8] : memref<80x1xf32, #tpu.memory_space<vmem>>, vector<16x1xf32>
    %c0_9 = arith.constant 0 : index
    %c0_10 = arith.constant 0 : index
    %6 = vector.load %arg3[%c0_9, %c0_10] : memref<128x9xf32, #tpu.memory_space<vmem>>, vector<128x9xf32>
    %cst = arith.constant dense<0.000000e+00> : vector<32x128xf32>
    %7 = tpu.matmul %0, %6, %cst {dimension_numbers = #tpu.dot_dimension_numbers<[1], [1], [0], [0], [0, 0, 1, 0], [], []>} : vector<32x9xf32>, vector<128x9xf32>, vector<32x128xf32> -> vector<32x128xf32>
    %8 = vector.broadcast %3 : vector<32x1xf32> to vector<32x128xf32>
    %9 = arith.addf %7, %8 : vector<32x128xf32>
    %cst_11 = arith.constant 0.000000e+00 : f32
    %10 = vector.broadcast %cst_11 : f32 to vector<32x128xf32>
    %11 = arith.maximumf %9, %10 : vector<32x128xf32>
    %cst_12 = arith.constant dense<0.000000e+00> : vector<32x128xf32>
    %12 = tpu.matmul %1, %11, %cst_12 {dimension_numbers = #tpu.dot_dimension_numbers<[1], [0], [0], [1], [0, 0, 1, 1], [], []>} : vector<32x32xf32>, vector<32x128xf32>, vector<32x128xf32> -> vector<32x128xf32>
    %13 = vector.broadcast %4 : vector<32x1xf32> to vector<32x128xf32>
    %14 = arith.addf %12, %13 : vector<32x128xf32>
    %cst_13 = arith.constant 0.000000e+00 : f32
    %15 = vector.broadcast %cst_13 : f32 to vector<32x128xf32>
    %16 = arith.maximumf %14, %15 : vector<32x128xf32>
    %cst_14 = arith.constant dense<0.000000e+00> : vector<16x128xf32>
    %17 = tpu.matmul %2, %16, %cst_14 {dimension_numbers = #tpu.dot_dimension_numbers<[1], [0], [0], [1], [0, 0, 1, 1], [], []>} : vector<16x32xf32>, vector<32x128xf32>, vector<16x128xf32> -> vector<16x128xf32>
    %18 = vector.broadcast %5 : vector<16x1xf32> to vector<16x128xf32>
    %19 = arith.addf %17, %18 : vector<16x128xf32>
    %20 = vector.extract_strided_slice %19 {offsets = [0, 0], sizes = [9, 128], strides = [1, 1]} : vector<16x128xf32> to vector<9x128xf32>
    %c0_15 = arith.constant 0 : index
    %c0_16 = arith.constant 0 : index
    %21 = vector.load %arg4[%c0_15, %c0_16] : memref<9x128xf32, #tpu.memory_space<vmem>>, vector<9x128xf32>
    tpu.vector_store %arg4[%c0_15, %c0_16], %20 {strides = array<i32>} : memref<9x128xf32, #tpu.memory_space<vmem>>, vector<9x128xf32>,
    return
  }
  func.func @transform_0(%arg0: i32) -> (i32, i32) {
    %c0_i32 = arith.constant 0 : i32
    %c0_i32_0 = arith.constant 0 : i32
    %c0_i32_1 = arith.constant 0 : i32
    return %c0_i32, %c0_i32_0 : i32, i32
  }
  func.func @transform_1(%arg0: i32) -> (i32, i32) {
    %c0_i32 = arith.constant 0 : i32
    %c0_i32_0 = arith.constant 0 : i32
    %c0_i32_1 = arith.constant 0 : i32
    return %c0_i32, %c0_i32_0 : i32, i32
  }
  func.func @transform_2(%arg0: i32) -> (i32, i32) {
    %c0_i32 = arith.constant 0 : i32
    %c0_i32_0 = arith.constant 0 : i32
    return %arg0, %c0_i32 : i32, i32
  }
  func.func @transform_3(%arg0: i32) -> (i32, i32) {
    %c0_i32 = arith.constant 0 : i32
    %c0_i32_0 = arith.constant 0 : i32
    return %c0_i32, %arg0 : i32, i32
  }
}

</mosaic_0001>

<llo_original>
// kernel: tpu_custom_call.1
$region0: #{tpu_custom_call.1}
  #allocation0 [shape = 'u32[]', space=smem, size = 0x4, offset = 0x4, fixed_abs, tag = 'smem constant byte address 0x4 - core index']
  #allocation1 [shape = 'u32[144,128]{1,0:T(1,128)}', space=vmem, size = 0x12000, scoped, tag = 'internal scratch']
  %s0 = inlined_call_operand.vmem [shape: f32[80,32], index: 0, kind: input, shape index: {}]
  %s1 = inlined_call_operand.vmem [shape: f32[80,1], index: 1, kind: input, shape index: {}]
  %s2 = inlined_call_operand.vmem [shape: f32[128,9], index: 2, kind: input, shape index: {}]
  %s3 = inlined_call_operand.hbm [shape: f32[9,128], index: 3, kind: output, shape index: {}]
  %s4 = sld [smem:[#allocation0]]
  $region22: #{tpu_custom_call.1} parent=0
    _
  %s6 = ssub.s32 1, %s4
  %s7 = scalar_select 0, %s6, %s4
  $region1: #{tpu_custom_call.1} parent=0
    #allocation2 [shape = 'u8[8192]{0}', space=vmem, size = 0x2000, scoped, tag = 'output window, operand 0, single buffered']
    #allocation3 [shape = 's32[1]{0}', space=sflag, size = 0x4, scoped, tag = 'scoped memory for tpu_custom_call.1']
    %8 = vsyncpa [#allocation3], 0
    // Predicated region
    $region2: #{tpu_custom_call.1} parent=1 // pred_check
      _
    $region3: #{tpu_custom_call.1} parent=1 // pred_check_branch
      %10 = sbr.rel (0) target = $region5
    $region4: #{tpu_custom_call.1} parent=1 // pred_region
      _
    $region5: #{tpu_custom_call.1} parent=1 // pred_fallthru
      _
    // Predicated region
    $region6: #{tpu_custom_call.1} parent=1 // pred_check
      _
    $region7: #{tpu_custom_call.1} parent=1 // pred_check_branch
      %12 = sbr.rel (0) target = $region9
    $region8: #{tpu_custom_call.1} parent=1 // pred_region
      _
    $region9: #{tpu_custom_call.1} parent=1 // pred_fallthru
      _
    // Predicated region
    $region10: #{tpu_custom_call.1} parent=1 // pred_check
      _
    $region11: #{tpu_custom_call.1} parent=1 // pred_check_branch
      %14 = sbr.rel (0) target = $region13
    $region12: #{tpu_custom_call.1} parent=1 // pred_region
      _
    $region13: #{tpu_custom_call.1} parent=1 // pred_fallthru
      _
    %v15 = vld [vmem:[%s0] sm:$0xff]
    %v16 = vld [vmem:[%s0 + $0x8] sm:$0xff]
    %v17 = vld [vmem:[%s0 + $0x10] sm:$0xff]
    %v18 = vld [vmem:[%s0 + $0x18] sm:$0xff]
    %v19 = vld [vmem:[%s0 + $0x20] sm:$0xff]
    %v20 = vld [vmem:[%s0 + $0x28] sm:$0xff]
    %v21 = vld [vmem:[%s0 + $0x30] sm:$0xff]
    %v22 = vld [vmem:[%s0 + $0x38] sm:$0xff]
    %v23 = vld [vmem:[%s0 + $0x40] sm:$0xff]
    %v24 = vld [vmem:[%s0 + $0x48] sm:$0xff]
    %v25 = vld [vmem:[%s1] sm:$0xff]
    %v26 = vld [vmem:[%s1 + $0x8] sm:$0xff]
    %v27 = vld [vmem:[%s1 + $0x10] sm:$0xff]
    %v28 = vld [vmem:[%s1 + $0x18] sm:$0xff]
    %v29 = vld [vmem:[%s1 + $0x20] sm:$0xff]
    %v30 = vld [vmem:[%s1 + $0x28] sm:$0xff]
    %v31 = vld [vmem:[%s1 + $0x30] sm:$0xff]
    %v32 = vld [vmem:[%s1 + $0x38] sm:$0xff]
    %v33 = vld [vmem:[%s1 + $0x40] sm:$0xff]
    %v34 = vld [vmem:[%s1 + $0x48] sm:$0xff]
    %v35 = vld [vmem:[%s2] sm:$0xff]
    %v36 = vld [vmem:[%s2 + $0x8] sm:$0xff]
    %v37 = vld [vmem:[%s2 + $0x10] sm:$0xff]
    %v38 = vld [vmem:[%s2 + $0x18] sm:$0xff]
    %v39 = vld [vmem:[%s2 + $0x20] sm:$0xff]
    %v40 = vld [vmem:[%s2 + $0x28] sm:$0xff]
    %v41 = vld [vmem:[%s2 + $0x30] sm:$0xff]
    %v42 = vld [vmem:[%s2 + $0x38] sm:$0xff]
    %v43 = vld [vmem:[%s2 + $0x40] sm:$0xff]
    %v44 = vld [vmem:[%s2 + $0x48] sm:$0xff]
    %v45 = vld [vmem:[%s2 + $0x50] sm:$0xff]
    %v46 = vld [vmem:[%s2 + $0x58] sm:$0xff]
    %v47 = vld [vmem:[%s2 + $0x60] sm:$0xff]
    %v48 = vld [vmem:[%s2 + $0x68] sm:$0xff]
    %v49 = vld [vmem:[%s2 + $0x70] sm:$0xff]
    %v50 = vld [vmem:[%s2 + $0x78] sm:$0xff]
    %52 = vset.pattern.permute.xlu0 0
    %53 = vperm.xlu0 %52, %v25
    %v54 = vpop.permute.xlu0 %53
    %57 = vset.pattern.permute.xlu0 0
    %58 = vperm.xlu0 %57, %v26
    %v59 = vpop.permute.xlu0 %58
    %62 = vset.pattern.permute.xlu0 0
    %63 = vperm.xlu0 %62, %v27
    %v64 = vpop.permute.xlu0 %63
    %67 = vset.pattern.permute.xlu0 0
    %68 = vperm.xlu0 %67, %v28
    %v69 = vpop.permute.xlu0 %68
    %vm71 = vcmask 72704
    %v73 = vsel %vm71, %v15, 0
    %v76 = vsel %vm71, %v16, 0
    %v79 = vsel %vm71, %v17, 0
    %v82 = vsel %vm71, %v18, 0
    %v85 = vsel %vm71, %v35, 0
    %v88 = vsel %vm71, %v36, 0
    %v91 = vsel %vm71, %v37, 0
    %v94 = vsel %vm71, %v38, 0
    %v97 = vsel %vm71, %v39, 0
    %v100 = vsel %vm71, %v40, 0
    %v103 = vsel %vm71, %v41, 0
    %v106 = vsel %vm71, %v42, 0
    %v109 = vsel %vm71, %v43, 0
    %v112 = vsel %vm71, %v44, 0
    %v115 = vsel %vm71, %v45, 0
    %v118 = vsel %vm71, %v46, 0
    %v121 = vsel %vm71, %v47, 0
    %v124 = vsel %vm71, %v48, 0
    %v127 = vsel %vm71, %v49, 0
    %v130 = vsel %vm71, %v50, 0
    %132 = vmatprep.subr.mxu0 0.0
    %133 = vmatpush1.xpose.msra.mxu0 %v85
    %134 = vmatprep.subr.mxu0 0.0
    %135 = vmatpush1.xpose.msra.mxu0 %v88
    %136 = vmatprep.subr.mxu0 0.0
    %137 = vmatpush1.xpose.msra.mxu0 %v91
    %138 = vmatprep.subr.mxu0 0.0
    %139 = vmatpush1.xpose.msra.mxu0 %v94
    %140 = vmatprep.subr.mxu0 0.0
    %141 = vmatpush1.xpose.msra.mxu0 %v97
    %142 = vmatprep.subr.mxu0 0.0
    %143 = vmatpush1.xpose.msra.mxu0 %v100
    %144 = vmatprep.subr.mxu0 0.0
    %145 = vmatpush1.xpose.msra.mxu0 %v103
    %146 = vmatprep.subr.mxu0 0.0
    %147 = vmatpush1.xpose.msra.mxu0 %v106
    %148 = vmatprep.subr.mxu0 0.0
    %149 = vmatpush1.xpose.msra.mxu0 %v109
    %150 = vmatprep.subr.mxu0 0.0
    %151 = vmatpush1.xpose.msra.mxu0 %v112
    %152 = vmatprep.subr.mxu0 0.0
    %153 = vmatpush1.xpose.msra.mxu0 %v115
    %154 = vmatprep.subr.mxu0 0.0
    %155 = vmatpush1.xpose.msra.mxu0 %v118
    %156 = vmatprep.subr.mxu0 0.0
    %157 = vmatpush1.xpose.msra.mxu0 %v121
    %158 = vmatprep.subr.mxu0 0.0
    %159 = vmatpush1.xpose.msra.mxu0 %v124
    %160 = vmatprep.subr.mxu0 0.0
    %161 = vmatpush1.xpose.msra.mxu0 %v127
    %162 = vmatprep.subr.mxu0 0.0
    %163 = vmatpush1.xpose.msra.mxu0 %v130
    %164 = vmatprep.subr.mxu0 0.0
    %165 = vmatpush1.xpose.msra.mxu0 0.0
    %166 = vmatprep.subr.mxu0 0.0
    %167 = vmatpush1.xpose.msra.mxu0 0.0
    %168 = vmatprep.subr.mxu0 0.0
    %169 = vmatpush1.xpose.msra.mxu0 0.0
    %170 = vmatprep.subr.mxu0 0.0
    %171 = vmatpush1.xpose.msra.mxu0 0.0
    %172 = vmatprep.subr.mxu0 0.0
    %173 = vmatpush1.xpose.msra.mxu0 0.0
    %174 = vmatprep.subr.mxu0 0.0
    %175 = vmatpush1.xpose.msra.mxu0 0.0
    %176 = vmatprep.subr.mxu0 0.0
    %177 = vmatpush1.xpose.msra.mxu0 0.0
    %178 = vmatprep.subr.mxu0 0.0
    %179 = vmatpush1.xpose.msra.mxu0 0.0
    %180 = vmatprep.subr.mxu0 0.0
    %181 = vmatpush1.xpose.msra.mxu0 0.0
    %182 = vmatprep.subr.mxu0 0.0
    %183 = vmatpush1.xpose.msra.mxu0 0.0
    %184 = vmatprep.subr.mxu0 0.0
    %185 = vmatpush1.xpose.msra.mxu0 0.0
    %186 = vmatprep.subr.mxu0 0.0
    %187 = vmatpush1.xpose.msra.mxu0 0.0
    %188 = vmatprep.subr.mxu0 0.0
    %189 = vmatpush1.xpose.msra.mxu0 0.0
    %190 = vmatprep.subr.mxu0 0.0
    %191 = vmatpush1.xpose.msra.mxu0 0.0
    %192 = vmatprep.subr.mxu0 0.0
    %193 = vmatpush1.xpose.msra.mxu0 0.0
    %194 = vmatprep.subr.mxu0 0.0
    %195 = vmatpush1.xpose.msra.mxu0 0.0
    %196 = vmatprep.mubr.f32.mxu0 0.0
    %197 = vmatmul.mubr.f32.gmra.mrb[0].mxu0 %v73
    %v198 = vpop.f32.mrb[0].mxu0
    %v199 = vadd.f32 %v54, %v198
    %v200 = vpop.f32.mrb[0].mxu0
    %201 = vmatprep.mubr.f32.mxu0 0.0
    %202 = vmatmul.mubr.f32.gmra.mrb[0].mxu0 %v76
    %v203 = vpop.f32.mrb[0].mxu0
    %v204 = vadd.f32 %v59, %v203
    %v205 = vpop.f32.mrb[0].mxu0
    %206 = vmatprep.mubr.f32.mxu0 0.0
    %207 = vmatmul.mubr.f32.gmra.mrb[0].mxu0 %v79
    %v208 = vpop.f32.mrb[0].mxu0
    %v209 = vadd.f32 %v64, %v208
    %v210 = vpop.f32.mrb[0].mxu0
    %211 = vmatprep.mubr.f32.mxu0 0.0
    %212 = vmatmul.mubr.f32.gmra.mrb[0].mxu0 %v82
    %v213 = vpop.f32.mrb[0].mxu0
    %v214 = vadd.f32 %v69, %v213
    %v215 = vpop.f32.mrb[0].mxu0
    %216 = vdwg.mxu0
    %v217 = vmax.f32 %v199, 0.0
    %v218 = vmax.f32 %v204, 0.0
    %v219 = vmax.f32 %v209, 0.0
    %v220 = vmax.f32 %v214, 0.0
    %222 = vset.pattern.permute.xlu0 0
    %223 = vperm.xlu0 %222, %v29
    %v224 = vpop.permute.xlu0 %223
    %227 = vset.pattern.permute.xlu0 0
    %228 = vperm.xlu0 %227, %v30
    %v229 = vpop.permute.xlu0 %228
    %232 = vset.pattern.permute.xlu0 0
    %233 = vperm.xlu0 %232, %v31
    %v234 = vpop.permute.xlu0 %233
    %237 = vset.pattern.permute.xlu0 0
    %238 = vperm.xlu0 %237, %v32
    %v239 = vpop.permute.xlu0 %238
    %vm241 = vcmask 261120
    %v243 = vsel %vm241, %v19, 0
    %v246 = vsel %vm241, %v20, 0
    %v249 = vsel %vm241, %v21, 0
    %v252 = vsel %vm241, %v22, 0
    %254 = vmatprep.subr.mxu0 0.0
    %255 = vmatpush1.msra.mxu0 %v217
    %256 = vmatprep.subr.mxu0 0.0
    %257 = vmatpush1.msra.mxu0 %v218
    %258 = vmatprep.subr.mxu0 0.0
    %259 = vmatpush1.msra.mxu0 %v219
    %260 = vmatprep.subr.mxu0 0.0
    %261 = vmatpush1.msra.mxu0 %v220
    %262 = vmatprep.subr.mxu0 0.0
    %263 = vmatpush1.msra.mxu0 0.0
    %264 = vmatprep.subr.mxu0 0.0
    %265 = vmatpush1.msra.mxu0 0.0
    %266 = vmatprep.subr.mxu0 0.0
    %267 = vmatpush1.msra.mxu0 0.0
    %268 = vmatprep.subr.mxu0 0.0
    %269 = vmatpush1.msra.mxu0 0.0
    %270 = vmatprep.subr.mxu0 0.0
    %271 = vmatpush1.msra.mxu0 0.0
    %272 = vmatprep.subr.mxu0 0.0
    %273 = vmatpush1.msra.mxu0 0.0
    %274 = vmatprep.subr.mxu0 0.0
    %275 = vmatpush1.msra.mxu0 0.0
    %276 = vmatprep.subr.mxu0 0.0
    %277 = vmatpush1.msra.mxu0 0.0
    %278 = vmatprep.subr.mxu0 0.0
    %279 = vmatpush1.msra.mxu0 0.0
    %280 = vmatprep.subr.mxu0 0.0
    %281 = vmatpush1.msra.mxu0 0.0
    %282 = vmatprep.subr.mxu0 0.0
    %283 = vmatpush1.msra.mxu0 0.0
    %284 = vmatprep.subr.mxu0 0.0
    %285 = vmatpush1.msra.mxu0 0.0
    %286 = vmatprep.subr.mxu0 0.0
    %287 = vmatpush1.msra.mxu0 0.0
    %288 = vmatprep.subr.mxu0 0.0
    %289 = vmatpush1.msra.mxu0 0.0
    %290 = vmatprep.subr.mxu0 0.0
    %291 = vmatpush1.msra.mxu0 0.0
    %292 = vmatprep.subr.mxu0 0.0
    %293 = vmatpush1.msra.mxu0 0.0
    %294 = vmatprep.subr.mxu0 0.0
    %295 = vmatpush1.msra.mxu0 0.0
    %296 = vmatprep.subr.mxu0 0.0
    %297 = vmatpush1.msra.mxu0 0.0
    %298 = vmatprep.subr.mxu0 0.0
    %299 = vmatpush1.msra.mxu0 0.0
    %300 = vmatprep.subr.mxu0 0.0
    %301 = vmatpush1.msra.mxu0 0.0
    %302 = vmatprep.subr.mxu0 0.0
    %303 = vmatpush1.msra.mxu0 0.0
    %304 = vmatprep.subr.mxu0 0.0
    %305 = vmatpush1.msra.mxu0 0.0
    %306 = vmatprep.subr.mxu0 0.0
    %307 = vmatpush1.msra.mxu0 0.0
    %308 = vmatprep.subr.mxu0 0.0
    %309 = vmatpush1.msra.mxu0 0.0
    %310 = vmatprep.subr.mxu0 0.0
    %311 = vmatpush1.msra.mxu0 0.0
    %312 = vmatprep.subr.mxu0 0.0
    %313 = vmatpush1.msra.mxu0 0.0
    %314 = vmatprep.subr.mxu0 0.0
    %315 = vmatpush1.msra.mxu0 0.0
    %316 = vmatprep.subr.mxu0 0.0
    %317 = vmatpush1.msra.mxu0 0.0
    %318 = vmatprep.mubr.f32.mxu0 0.0
    %319 = vmatmul.mubr.f32.gmra.mrb[0].mxu0 %v243
    %v320 = vpop.f32.mrb[0].mxu0
    %v321 = vadd.f32 %v224, %v320
    %v322 = vpop.f32.mrb[0].mxu0
    %323 = vmatprep.mubr.f32.mxu0 0.0
    %324 = vmatmul.mubr.f32.gmra.mrb[0].mxu0 %v246
    %v325 = vpop.f32.mrb[0].mxu0
    %v326 = vadd.f32 %v229, %v325
    %v327 = vpop.f32.mrb[0].mxu0
    %328 = vmatprep.mubr.f32.mxu0 0.0
    %329 = vmatmul.mubr.f32.gmra.mrb[0].mxu0 %v249
    %v330 = vpop.f32.mrb[0].mxu0
    %v331 = vadd.f32 %v234, %v330
    %v332 = vpop.f32.mrb[0].mxu0
    %333 = vmatprep.mubr.f32.mxu0 0.0
    %334 = vmatmul.mubr.f32.gmra.mrb[0].mxu0 %v252
    %v335 = vpop.f32.mrb[0].mxu0
    %v336 = vadd.f32 %v239, %v335
    %v337 = vpop.f32.mrb[0].mxu0
    %338 = vdwg.mxu0
    %v339 = vmax.f32 %v321, 0.0
    %v340 = vmax.f32 %v326, 0.0
    %v341 = vmax.f32 %v331, 0.0
    %v342 = vmax.f32 %v336, 0.0
    %344 = vset.pattern.permute.xlu0 0
    %345 = vperm.xlu0 %344, %v33
    %v346 = vpop.permute.xlu0 %345
    %349 = vset.pattern.permute.xlu0 0
    %350 = vperm.xlu0 %349, %v34
    %v351 = vpop.permute.xlu0 %350
    %v354 = vsel %vm241, %v23, 0
    %v357 = vsel %vm241, %v24, 0
    %359 = vmatprep.subr.mxu0 0.0
    %360 = vmatpush1.msra.mxu0 %v339
    %361 = vmatprep.subr.mxu0 0.0
    %362 = vmatpush1.msra.mxu0 %v340
    %363 = vmatprep.subr.mxu0 0.0
    %364 = vmatpush1.msra.mxu0 %v341
    %365 = vmatprep.subr.mxu0 0.0
    %366 = vmatpush1.msra.mxu0 %v342
    %367 = vmatprep.subr.mxu0 0.0
    %368 = vmatpush1.msra.mxu0 0.0
    %369 = vmatprep.subr.mxu0 0.0
    %370 = vmatpush1.msra.mxu0 0.0
    %371 = vmatprep.subr.mxu0 0.0
    %372 = vmatpush1.msra.mxu0 0.0
    %373 = vmatprep.subr.mxu0 0.0
    %374 = vmatpush1.msra.mxu0 0.0
    %375 = vmatprep.subr.mxu0 0.0
    %376 = vmatpush1.msra.mxu0 0.0
    %377 = vmatprep.subr.mxu0 0.0
    %378 = vmatpush1.msra.mxu0 0.0
    %379 = vmatprep.subr.mxu0 0.0
    %380 = vmatpush1.msra.mxu0 0.0
    %381 = vmatprep.subr.mxu0 0.0
    %382 = vmatpush1.msra.mxu0 0.0
    %383 = vmatprep.subr.mxu0 0.0
    %384 = vmatpush1.msra.mxu0 0.0
    %385 = vmatprep.subr.mxu0 0.0
    %386 = vmatpush1.msra.mxu0 0.0
    %387 = vmatprep.subr.mxu0 0.0
    %388 = vmatpush1.msra.mxu0 0.0
    %389 = vmatprep.subr.mxu0 0.0
    %390 = vmatpush1.msra.mxu0 0.0
    %391 = vmatprep.subr.mxu0 0.0
    %392 = vmatpush1.msra.mxu0 0.0
    %393 = vmatprep.subr.mxu0 0.0
    %394 = vmatpush1.msra.mxu0 0.0
    %395 = vmatprep.subr.mxu0 0.0
    %396 = vmatpush1.msra.mxu0 0.0
    %397 = vmatprep.subr.mxu0 0.0
    %398 = vmatpush1.msra.mxu0 0.0
    %399 = vmatprep.subr.mxu0 0.0
    %400 = vmatpush1.msra.mxu0 0.0
    %401 = vmatprep.subr.mxu0 0.0
    %402 = vmatpush1.msra.mxu0 0.0
    %403 = vmatprep.subr.mxu0 0.0
    %404 = vmatpush1.msra.mxu0 0.0
    %405 = vmatprep.subr.mxu0 0.0
    %406 = vmatpush1.msra.mxu0 0.0
    %407 = vmatprep.subr.mxu0 0.0
    %408 = vmatpush1.msra.mxu0 0.0
    %409 = vmatprep.subr.mxu0 0.0
    %410 = vmatpush1.msra.mxu0 0.0
    %411 = vmatprep.subr.mxu0 0.0
    %412 = vmatpush1.msra.mxu0 0.0
    %413 = vmatprep.subr.mxu0 0.0
    %414 = vmatpush1.msra.mxu0 0.0
    %415 = vmatprep.subr.mxu0 0.0
    %416 = vmatpush1.msra.mxu0 0.0
    %417 = vmatprep.subr.mxu0 0.0
    %418 = vmatpush1.msra.mxu0 0.0
    %419 = vmatprep.subr.mxu0 0.0
    %420 = vmatpush1.msra.mxu0 0.0
    %421 = vmatprep.subr.mxu0 0.0
    %422 = vmatpush1.msra.mxu0 0.0
    %423 = vmatprep.mubr.f32.mxu0 0.0
    %424 = vmatmul.mubr.f32.gmra.mrb[0].mxu0 %v354
    %v425 = vpop.f32.mrb[0].mxu0
    %v426 = vadd.f32 %v346, %v425
    %v427 = vpop.f32.mrb[0].mxu0
    %428 = vmatprep.mubr.f32.mxu0 0.0
    %429 = vmatmul.mubr.f32.gmra.mrb[0].mxu0 %v357
    %v430 = vpop.f32.mrb[0].mxu0
    %v431 = vadd.f32 %v351, %v430
    %v432 = vpop.f32.mrb[0].mxu0
    %433 = vdwg.mxu0
    %434 = vst [vmem:[#allocation2] sm:$0xff] %v426
    %435 = vst [vmem:[#allocation2 + $0x8] sm:$0x1] %v431
    // Predicated region
    $region14: #{tpu_custom_call.1} parent=1 // pred_check
      _
    $region15: #{tpu_custom_call.1} parent=1 // pred_check_branch
      %437 = sbr.rel (0) target = $region17
    $region16: #{tpu_custom_call.1} parent=1 // pred_region
      %s439 = ssub.s32 256, 256
      %440 = vsyncadd [#allocation3], %s439
      %s441 = sshll.u32 [#allocation2], 4
      %s442 = int_to_ptr.vmem [resolvable:$true] %s441
      %447 = dma.vmem_to_hbm [thread:$0]  %s442, 256, %s3, [#allocation3], 128, 128, 8
    $region17: #{tpu_custom_call.1} parent=1 // pred_fallthru
      _
    // Predicated region
    $region18: #{tpu_custom_call.1} parent=1 // pred_check
      _
    $region19: #{tpu_custom_call.1} parent=1 // pred_check_branch
      %449 = sbr.rel (0) target = $region21
    $region20: #{tpu_custom_call.1} parent=1 // pred_region
      %450 = dma.done [#allocation3], 256
    $region21: #{tpu_custom_call.1} parent=1 // pred_fallthru
      _
    %451 = vsyncpa [#allocation3], 1

</llo_original>
